<compile_context>
chip_gen: v6e
topology: v6e:2x2x1
jax: 0.10.0
libtpu: 0.0.40
codegen_flags: <defaults>
</compile_context>

<pallas_src>
import math

import jax
import jax.numpy as jnp
from jax.experimental import pallas as pl
from jax.experimental.pallas import tpu as pltpu


def _standard_scaler_kernel(x_ref, mean_ref, inv_var_ref, out_ref):
    # x_ref:       (TB, TC) tile of the (possibly lane-folded) input
    # mean_ref:    (1, TC)  per-feature mean, f32   (broadcast over rows)
    # inv_var_ref: (1, TC)  per-feature 1/var, f32  (broadcast over rows)
    x = x_ref[...].astype(jnp.float32)
    out_ref[...] = ((x - mean_ref[...]) * inv_var_ref[...]).astype(out_ref.dtype)


def _round_up(a, b):
    return ((a + b - 1) // b) * b


def _tile_budget_and_vmem_limit():
    """Per-generation (target_tile_bytes, vmem_limit_bytes)."""
    vmem = None
    try:
        info = pltpu.get_tpu_info()
        vmem = getattr(info, "vmem_capacity_bytes", None)
    except Exception:
        vmem = None
    if vmem is not None and vmem <= 64 * 1024 * 1024:
        # v7x-class: 64 MiB per-TC VMEM, very high HBM BW -> bigger tiles,
        # scoped limit raised so 2x(in + out) double buffers fit.
        return 8 * 1024 * 1024, 48 * 1024 * 1024
    # v5e / v6e (128 MiB physical VMEM): 4 MiB tiles; raise the scoped limit
    # explicitly so v5e's 16 MiB default is not the binding constraint.
    return 4 * 1024 * 1024, 32 * 1024 * 1024


def standard_scaler(x, tensor_mean, tensor_var, *, block_rows=None,
                    target_tile_bytes=None):
    """(X - mean) / var with per-feature mean/var, X of shape [N, F]."""
    n, f = x.shape
    assert tensor_mean.shape == (f,)
    assert tensor_var.shape == (f,)

    out_dtype = x.dtype
    itemsize = jnp.dtype(x.dtype).itemsize
    sublane = 8 * max(1, 4 // itemsize)  # 8 f32, 16 bf16, 32 int8/fp8

    tile_budget, vmem_limit = _tile_budget_and_vmem_limit()
    if target_tile_bytes is not None:
        tile_budget = int(target_tile_bytes)

    # Per-feature params in f32; divide hoisted to one reciprocal on (F,).
    mean_f32 = tensor_mean.reshape(-1).astype(jnp.float32)
    inv_var_f32 = 1.0 / tensor_var.reshape(-1).astype(jnp.float32)

    # Lane-dense fold: any F that is not a multiple of 128 gets `fold`
    # consecutive rows folded into the lane axis (pure reshape) so stores are
    # full-width, capped so the folded width stays a few thousand lanes.
    fold = 1
    if f % 128 != 0:
        cand = 128 // math.gcd(f, 128)
        if f * cand <= 8192:
            fold = cand
    f_work = f * fold

    # Pad rows only to a multiple of `fold` (<= fold-1 rows, only when a fold
    # is in use and N is ragged); the grid below uses cdiv so no padding to
    # the block granule is ever needed.
    n_pad = _round_up(n, fold)
    x_work = x
    if n_pad != n:
        x_work = jnp.pad(x, ((0, n_pad - n), (0, 0)))
    n_work = n_pad // fold
    if fold > 1:
        x_work = x_work.reshape(n_work, f_work)
        mean_w = jnp.tile(mean_f32, fold).reshape(1, f_work)
        inv_w = jnp.tile(inv_var_f32, fold).reshape(1, f_work)
    else:
        mean_w = mean_f32.reshape(1, f_work)
        inv_w = inv_var_f32.reshape(1, f_work)

    # Column tiling: prefer full-width row stripes (one contiguous HBM segment
    # per DMA); only split the lane axis for extremely wide feature dims.
    if sublane * f_work * itemsize <= tile_budget:
        block_cols = f_work
    else:
        block_cols = max(128, (tile_budget // (sublane * itemsize)) // 128 * 128)

    # Row tile sized to ~tile_budget, sublane-aligned, never larger than the
    # array, and capped so the row grid has at least 2 steps when there are
    # enough rows (dual-TC sharding on v7x + DMA/compute overlap everywhere).
    if block_rows is None:
        block_rows = max(sublane, tile_budget // max(block_cols * itemsize, 1))
    block_rows = max(int(block_rows), 1)
    if n_work >= 2 * sublane:
        block_rows = min(block_rows, pl.cdiv(n_work, 2))
    if block_rows >= n_work or n_work <= sublane:
        block_rows = n_work                      # single block == full extent
    else:
        block_rows = max(sublane, (block_rows // sublane) * sublane)

    grid = (pl.cdiv(n_work, block_rows), pl.cdiv(f_work, block_cols))

    out_work = pl.pallas_call(
        _standard_scaler_kernel,
        out_shape=jax.ShapeDtypeStruct((n_work, f_work), out_dtype),
        grid_spec=pltpu.PrefetchScalarGridSpec(
            num_scalar_prefetch=0,
            grid=grid,
            in_specs=[
                pl.BlockSpec((block_rows, block_cols), lambda i, j: (i, j)),
                pl.BlockSpec((1, block_cols), lambda i, j: (0, j)),
                pl.BlockSpec((1, block_cols), lambda i, j: (0, j)),
            ],
            out_specs=pl.BlockSpec((block_rows, block_cols),
                                   lambda i, j: (i, j)),
        ),
        compiler_params=pltpu.CompilerParams(
            dimension_semantics=("parallel", "parallel"),
            vmem_limit_bytes=vmem_limit,
        ),
    )(x_work, mean_w, inv_w)

    out = out_work.reshape(n_pad, f)
    if n_pad != n:
        out = out[:n]
    return out


def _reference(x, mean, var):
    return ((x.astype(jnp.float32) - mean[None, :].astype(jnp.float32))
            / var[None, :].astype(jnp.float32)).astype(x.dtype)


if __name__ == "__main__":
    key = jax.random.PRNGKey(0)
    k_x, k_m, k_v, k_x2, k_x3 = jax.random.split(key, 5)

    # Case 1: small-F lane-fold path (F=32 -> fold=4), default tiling.
    batch, n_features = 256, 32
    x = jax.random.normal(k_x, (batch, n_features), dtype=jnp.float32)
    tensor_mean = jax.random.normal(k_m, (n_features,), dtype=jnp.float32) * 0.5
    tensor_var = jax.random.uniform(
        k_v, (n_features,), dtype=jnp.float32, minval=0.5, maxval=2.0)

    out = standard_scaler(x, tensor_mean, tensor_var)
    jax.block_until_ready(out)
    ref = _reference(x, tensor_mean, tensor_var)
    assert jnp.allclose(out, ref, atol=1e-5, rtol=1e-5), "mismatch (case 1)"

    # Case 2: ragged N (fold-granule pad) + explicit small block_rows ->
    # multi-step grid with clipped boundary block.
    x_odd = x[:250]
    out2 = standard_scaler(x_odd, tensor_mean, tensor_var, block_rows=16)
    jax.block_until_ready(out2)
    ref2 = _reference(x_odd, tensor_mean, tensor_var)
    assert jnp.allclose(out2, ref2, atol=1e-5, rtol=1e-5), "mismatch (case 2)"

    # Case 3: F multiple of 128 (no fold), full-width stripes.
    f3 = 256
    x3 = jax.random.normal(k_x2, (64, f3), dtype=jnp.float32)
    mean3 = jnp.linspace(-1.0, 1.0, f3, dtype=jnp.float32)
    var3 = jnp.linspace(0.5, 2.0, f3, dtype=jnp.float32)
    out3 = standard_scaler(x3, mean3, var3)
    jax.block_until_ready(out3)
    ref3 = _reference(x3, mean3, var3)
    assert jnp.allclose(out3, ref3, atol=1e-5, rtol=1e-5), "mismatch (case 3)"

    # Case 4: F not a multiple of 128 and >= 128 (extended fold: 192 -> x2).
    f4 = 192
    x4 = jax.random.normal(k_x3, (40, f4), dtype=jnp.float32)
    mean4 = jnp.linspace(-0.5, 0.5, f4, dtype=jnp.float32)
    var4 = jnp.linspace(0.75, 1.5, f4, dtype=jnp.float32)
    out4 = standard_scaler(x4, mean4, var4)
    jax.block_until_ready(out4)
    ref4 = _reference(x4, mean4, var4)
    assert jnp.allclose(out4, ref4, atol=1e-5, rtol=1e-5), "mismatch (case 4)"

    print("KERNEL_OK")
</pallas_src>

<mosaic_0001>
module attributes {stable_mosaic.version = 11 : i64} {
  func.func @_standard_scaler_kernel(%arg0: i32, %arg1: i32, %arg2: memref<32x128xf32, #tpu.memory_space<vmem>>, %arg3: memref<1x128xf32, #tpu.memory_space<vmem>>, %arg4: memref<1x128xf32, #tpu.memory_space<vmem>>, %arg5: memref<32x128xf32, #tpu.memory_space<vmem>>) attributes {dimension_semantics = [#tpu.dimension_semantics<parallel>, #tpu.dimension_semantics<parallel>], iteration_bounds = array<i64: 2, 1>, scalar_prefetch = 0 : i64, scratch_operands = 0 : i64, tpu.core_type = #tpu.core_type<tc>, window_params = [{transform_indices = @transform_0, window_bounds = array<i64: 32, 128>}, {transform_indices = @transform_1, window_bounds = array<i64: 1, 128>}, {transform_indices = @transform_2, window_bounds = array<i64: 1, 128>}, {transform_indices = @transform_3, window_bounds = array<i64: 32, 128>}]} {
    %c0 = arith.constant 0 : index
    %c0_0 = arith.constant 0 : index
    %0 = vector.load %arg2[%c0, %c0_0] : memref<32x128xf32, #tpu.memory_space<vmem>>, vector<32x128xf32>
    %c0_1 = arith.constant 0 : index
    %c0_2 = arith.constant 0 : index
    %1 = vector.load %arg3[%c0_1, %c0_2] : memref<1x128xf32, #tpu.memory_space<vmem>>, vector<1x128xf32>
    %2 = vector.broadcast %1 : vector<1x128xf32> to vector<32x128xf32>
    %3 = arith.subf %0, %2 : vector<32x128xf32>
    %c0_3 = arith.constant 0 : index
    %c0_4 = arith.constant 0 : index
    %4 = vector.load %arg4[%c0_3, %c0_4] : memref<1x128xf32, #tpu.memory_space<vmem>>, vector<1x128xf32>
    %5 = vector.broadcast %4 : vector<1x128xf32> to vector<32x128xf32>
    %6 = arith.mulf %3, %5 : vector<32x128xf32>
    %c0_5 = arith.constant 0 : index
    %c0_6 = arith.constant 0 : index
    %7 = vector.load %arg5[%c0_5, %c0_6] : memref<32x128xf32, #tpu.memory_space<vmem>>, vector<32x128xf32>
    tpu.vector_store %arg5[%c0_5, %c0_6], %6 {strides = array<i32>} : memref<32x128xf32, #tpu.memory_space<vmem>>, vector<32x128xf32>,
    return
  }
  func.func @transform_0(%arg0: i32, %arg1: i32) -> (i32, i32) {
    %c0_i32 = arith.constant 0 : i32
    return %arg0, %arg1 : i32, i32
  }
  func.func @transform_1(%arg0: i32, %arg1: i32) -> (i32, i32) {
    %c0_i32 = arith.constant 0 : i32
    %c0_i32_0 = arith.constant 0 : i32
    return %c0_i32, %arg1 : i32, i32
  }
  func.func @transform_2(%arg0: i32, %arg1: i32) -> (i32, i32) {
    %c0_i32 = arith.constant 0 : i32
    %c0_i32_0 = arith.constant 0 : i32
    return %c0_i32, %arg1 : i32, i32
  }
  func.func @transform_3(%arg0: i32, %arg1: i32) -> (i32, i32) {
    %c0_i32 = arith.constant 0 : i32
    return %arg0, %arg1 : i32, i32
  }
}

</mosaic_0001>

<llo_original>
// kernel: tpu_custom_call.1
$region0: #{tpu_custom_call.1}
  #allocation0 [shape = 'u32[]', space=smem, size = 0x4, offset = 0x4, fixed_abs, tag = 'smem constant byte address 0x4 - core index']
  #allocation1 [shape = 'u32[144,128]{1,0:T(1,128)}', space=vmem, size = 0x12000, scoped, tag = 'internal scratch']
  %s0 = inlined_call_operand.hbm [shape: f32[64,128], index: 0, kind: input, shape index: {}]
  %s1 = inlined_call_operand.vmem [shape: f32[1,128], index: 1, kind: input, shape index: {}]
  %s2 = inlined_call_operand.vmem [shape: f32[1,128], index: 2, kind: input, shape index: {}]
  %s3 = inlined_call_operand.hbm [shape: f32[64,128], index: 3, kind: output, shape index: {}]
  %s4 = sld [smem:[#allocation0]]
  $region49: #{tpu_custom_call.1} parent=0
    _
  %s6 = ssub.s32 1, %s4
  %s7 = scalar_select 0, %s6, %s4
  $region1: #{tpu_custom_call.1} parent=0
    #allocation2 [shape = 'u8[32768]{0}', space=vmem, size = 0x8000, scoped, tag = 'input window, operand 0']
    #allocation3 [shape = 's32[2]{0}', space=sflag, size = 0x8, scoped, tag = 'scoped memory for tpu_custom_call.1']
    #allocation4 [shape = 's32[2]{0}', space=sflag, size = 0x8, scoped, tag = 'scoped memory for tpu_custom_call.1']
    #allocation5 [shape = 'u8[32768]{0}', space=vmem, size = 0x8000, scoped, tag = 'output window, operand 0']
    %8 = vsyncpa [#allocation3], 0
    %s9 = scalar_lea.sflag [#allocation3], 1
    %10 = vsyncpa %s9, 0
    %11 = vsyncpa [#allocation4], 0
    %s12 = scalar_lea.sflag [#allocation4], 1
    %13 = vsyncpa %s12, 0
    loop: start=0, step=1, limit=4
    $region2: #{tpu_custom_call.1} parent=1 // loop_pre_header
      _
    $region3: #{tpu_custom_call.1} parent=1 // loop_header
      %s15 = sphi 0, %s19
      %p16 = scmp.ge.s32.totalorder %s15, 4
      %s22 = sphi 0, %s34
      %s23 = sphi 0, %s30
      %s24 = sphi 0, %s22
      %s25 = sphi 0, %s23
      %s26 = sphi 0, %s24
      %s27 = sphi 0, %s25
      %s39 = sphi 0, %s41
      %s42 = sphi 0, %s39
      %s43 = sphi 0, %s42
      %s59 = sphi 0, %s43
      %s65 = sphi 0, %s67
      %s68 = sphi 0, %s65
      %s69 = sphi 0, %s68
      %s85 = sphi 0, %s69
      %s91 = sphi 0, %s93
      %s94 = sphi 0, %s91
      %s95 = sphi 0, %s94
      %s111 = sphi 0, %s95
      %s119 = sphi 0, %s121
      %s122 = sphi 0, %s119
      %s123 = sphi 0, %s122
      %s139 = sphi 0, %s123
    $region4: #{tpu_custom_call.1} parent=1 // loop_header_branch
      %18 = sbr.rel (%p16) target = $region8
    $region5: #{tpu_custom_call.1} parent=1 // loop_body
      %s20 = ssub.s32 %s15, 1
      %s21 = ssub.s32 %s15, 2
      %s28 = sadd.s32 1, %s23
      %p29 = scmp.ge.s32.totalorder %s28, 1
      %s30 = scalar_select %p29, 0, %s28
      %s31 = sadd.s32 1, %s22
      %s32 = scalar_select %p29, %s31, %s22
      %p33 = scmp.ge.s32.totalorder %s32, 2
      %s34 = scalar_select %p33, 0, %s32
      %s35 = ssub.s32 %s22, %s34
      %s36 = ssub.s32 %s23, %s30
      %s37 = sor.u32 %s35, %s36
      %p38 = scmp.eq.s32.totalorder %s37, 0
      %s40 = sadd.s32 %s39, 1
      %s41 = scalar_select %p38, %s39, %s40
      %p44 = pneg %p38
      %p45 = scmp.eq.s32.totalorder %s15, 1
      %p46 = por %p44, %p45
      %p47 = scmp.ne.s32.totalorder %s39, %s42
      %p48 = scmp.eq.s32.totalorder %s15, 0
      %p49 = por %p47, %p48
      %p50 = scmp.ne.s32.totalorder %s39, %s42
      %p51 = scmp.eq.s32.totalorder %s20, 1
      %p52 = por %p50, %p51
      %p53 = scmp.ne.s32.totalorder %s42, %s43
      %p54 = scmp.eq.s32.totalorder %s20, 0
      %p55 = por %p53, %p54
      %p56 = scmp.ne.s32.totalorder %s42, %s43
      %p57 = scmp.eq.s32.totalorder %s21, 1
      %p58 = por %p56, %p57
      %p60 = scmp.ne.s32.totalorder %s43, %s59
      %p61 = scmp.eq.s32.totalorder %s21, 0
      %p62 = por %p60, %p61
      %s63 = ssub.s32 %s23, %s30
      %p64 = scmp.eq.s32.totalorder %s63, 0
      %s66 = sadd.s32 %s65, 1
      %s67 = scalar_select %p64, %s65, %s66
      %p70 = pneg %p64
      %p71 = scmp.eq.s32.totalorder %s15, 1
      %p72 = por %p70, %p71
      %p73 = scmp.ne.s32.totalorder %s65, %s68
      %p74 = scmp.eq.s32.totalorder %s15, 0
      %p75 = por %p73, %p74
      %p76 = scmp.ne.s32.totalorder %s65, %s68
      %p77 = scmp.eq.s32.totalorder %s20, 1
      %p78 = por %p76, %p77
      %p79 = scmp.ne.s32.totalorder %s68, %s69
      %p80 = scmp.eq.s32.totalorder %s20, 0
      %p81 = por %p79, %p80
      %p82 = scmp.ne.s32.totalorder %s68, %s69
      %p83 = scmp.eq.s32.totalorder %s21, 1
      %p84 = por %p82, %p83
      %p86 = scmp.ne.s32.totalorder %s69, %s85
      %p87 = scmp.eq.s32.totalorder %s21, 0
      %p88 = por %p86, %p87
      %s89 = ssub.s32 %s23, %s30
      %p90 = scmp.eq.s32.totalorder %s89, 0
      %s92 = sadd.s32 %s91, 1
      %s93 = scalar_select %p90, %s91, %s92
      %p96 = pneg %p90
      %p97 = scmp.eq.s32.totalorder %s15, 1
      %p98 = por %p96, %p97
      %p99 = scmp.ne.s32.totalorder %s91, %s94
      %p100 = scmp.eq.s32.totalorder %s15, 0
      %p101 = por %p99, %p100
      %p102 = scmp.ne.s32.totalorder %s91, %s94
      %p103 = scmp.eq.s32.totalorder %s20, 1
      %p104 = por %p102, %p103
      %p105 = scmp.ne.s32.totalorder %s94, %s95
      %p106 = scmp.eq.s32.totalorder %s20, 0
      %p107 = por %p105, %p106
      %p108 = scmp.ne.s32.totalorder %s94, %s95
      %p109 = scmp.eq.s32.totalorder %s21, 1
      %p110 = por %p108, %p109
      %p112 = scmp.ne.s32.totalorder %s95, %s111
      %p113 = scmp.eq.s32.totalorder %s21, 0
      %p114 = por %p112, %p113
      %s115 = ssub.s32 %s22, %s34
      %s116 = ssub.s32 %s23, %s30
      %s117 = sor.u32 %s115, %s116
      %p118 = scmp.eq.s32.totalorder %s117, 0
      %s120 = sadd.s32 %s119, 1
      %s121 = scalar_select %p118, %s119, %s120
      %p124 = pneg %p118
      %p125 = scmp.eq.s32.totalorder %s15, 1
      %p126 = por %p124, %p125
      %p127 = scmp.ne.s32.totalorder %s119, %s122
      %p128 = scmp.eq.s32.totalorder %s15, 0
      %p129 = por %p127, %p128
      %p130 = scmp.ne.s32.totalorder %s119, %s122
      %p131 = scmp.eq.s32.totalorder %s20, 1
      %p132 = por %p130, %p131
      %p133 = scmp.ne.s32.totalorder %s122, %s123
      %p134 = scmp.eq.s32.totalorder %s20, 0
      %p135 = por %p133, %p134
      %p136 = scmp.ne.s32.totalorder %s122, %s123
      %p137 = scmp.eq.s32.totalorder %s21, 1
      %p138 = por %p136, %p137
      %p140 = scmp.ne.s32.totalorder %s123, %s139
      %p141 = scmp.eq.s32.totalorder %s21, 0
      %p142 = por %p140, %p141
      %p143 = scmp.le.s32.totalorder 1, %s15
      %p144 = scmp.lt.s32.totalorder %s15, 3
      %p145 = pnand %p143, %p144
      %p146 = pneg %p145
      // Predicated region
      $region9: #{tpu_custom_call.1} parent=5 // pred_check
        _
      $region10: #{tpu_custom_call.1} parent=5 // pred_check_branch
        %148 = sbr.rel (%p145) target = $region12
      $region11: #{tpu_custom_call.1} parent=5 // pred_region
        %s149 = ssub.s32 %s15, 1
        // Predicated region
        $region13: #{tpu_custom_call.1} parent=11 // pred_check
          %p150 = pneg %p81
        $region14: #{tpu_custom_call.1} parent=11 // pred_check_branch
          %152 = sbr.rel (%p150) target = $region16
        $region15: #{tpu_custom_call.1} parent=11 // pred_region
          %p153 = scmp.lt.s32.totalorder %s25, 0
          %s154 = scalar_select %p153, %s25, 0
          %s155 = scalar_lea.vmem %s1, %s154
        $region16: #{tpu_custom_call.1} parent=11 // pred_fallthru
          _
        // Predicated region
        $region17: #{tpu_custom_call.1} parent=11 // pred_check
          %p156 = pneg %p107
        $region18: #{tpu_custom_call.1} parent=11 // pred_check_branch
          %158 = sbr.rel (%p156) target = $region20
        $region19: #{tpu_custom_call.1} parent=11 // pred_region
          %p159 = scmp.lt.s32.totalorder %s25, 0
          %s160 = scalar_select %p159, %s25, 0
          %s161 = scalar_lea.vmem %s2, %s160
        $region20: #{tpu_custom_call.1} parent=11 // pred_fallthru
          _
      $region12: #{tpu_custom_call.1} parent=5 // pred_fallthru
        _
      %p162 = scmp.lt.s32.totalorder %s15, 2
      // Predicated region
      $region21: #{tpu_custom_call.1} parent=5 // pred_check
        %p163 = pneg %p162
      $region22: #{tpu_custom_call.1} parent=5 // pred_check_branch
        %165 = sbr.rel (%p163) target = $region24
      $region23: #{tpu_custom_call.1} parent=5 // pred_region
        // Predicated region
        $region25: #{tpu_custom_call.1} parent=23 // pred_check
          %p166 = pneg %p49
        $region26: #{tpu_custom_call.1} parent=23 // pred_check_branch
          %168 = sbr.rel (%p166) target = $region28
        $region27: #{tpu_custom_call.1} parent=23 // pred_region
          %s169 = sand.u32 %s39, 1
          %s170 = scalar_lea.sflag [#allocation3], %s169
          %s171 = sand.u32 %s39, 1
          %s172 = smul.addr %s171, 32
          %s173 = scalar_lea.vmem [#allocation2], %s172
          %s174 = smul.u32 4, %s22
          %s176 = ssub.s32 512, 512
          %177 = vsyncadd %s170, %s176
          %s178 = sadd.s32 %s23, %s174
          %s179 = smul.addr %s178, 128
          %s180 = scalar_lea.hbm %s0, %s179
          %s181 = sshll.u32 %s173, 4
          %s182 = int_to_ptr.vmem [resolvable:$true] %s181
          %187 = dma.hbm_to_vmem [thread:$0]  %s180, 512, %s182, %s170, 128, 128, 8
        $region28: #{tpu_custom_call.1} parent=23 // pred_fallthru
          _
      $region24: #{tpu_custom_call.1} parent=5 // pred_fallthru
        _
      %p188 = scmp.le.s32.totalorder 1, %s15
      %p189 = scmp.lt.s32.totalorder %s15, 3
      %p190 = pnand %p188, %p189
      %p191 = pneg %p190
      // Predicated region
      $region29: #{tpu_custom_call.1} parent=5 // pred_check
        _
      $region30: #{tpu_custom_call.1} parent=5 // pred_check_branch
        %193 = sbr.rel (%p190) target = $region32
      $region31: #{tpu_custom_call.1} parent=5 // pred_region
        %s194 = ssub.s32 %s15, 1
        %s195 = sand.u32 %s42, 1
        %s196 = scalar_lea.sflag [#allocation3], %s195
        %s197 = sand.u32 %s42, 1
        %s198 = smul.addr %s197, 32
        %s199 = scalar_lea.vmem [#allocation2], %s198
        // Predicated region
        $region33: #{tpu_custom_call.1} parent=31 // pred_check
          %p200 = pneg %p55
        $region34: #{tpu_custom_call.1} parent=31 // pred_check_branch
          %202 = sbr.rel (%p200) target = $region36
        $region35: #{tpu_custom_call.1} parent=31 // pred_region
          %203 = dma.done %s196, 512
        $region36: #{tpu_custom_call.1} parent=31 // pred_fallthru
          _
        %s204 = sand.u32 %s42, 1
        %s205 = scalar_lea.sflag [#allocation3], %s204
        %s206 = sand.u32 %s42, 1
        %s207 = smul.addr %s206, 32
        %s208 = scalar_lea.vmem [#allocation2], %s207
        %p209 = pneg %p55
        %p210 = pneg %p52
        %p211 = scmp.lt.s32.totalorder %s25, 0
        %s212 = scalar_select %p211, %s25, 0
        %s213 = scalar_lea.vmem %s1, %s212
        %p214 = pneg %p81
        %p215 = pneg %p78
        %p216 = scmp.lt.s32.totalorder %s25, 0
        %s217 = scalar_select %p216, %s25, 0
        %s218 = scalar_lea.vmem %s2, %s217
        %p219 = pneg %p107
        %p220 = pneg %p104
        %p221 = pneg %p135
        %p222 = pneg %p132
        %s223 = sand.u32 %s122, 1
        %s224 = scalar_lea.sflag [#allocation4], %s223
        %s225 = sand.u32 %s122, 1
        %s226 = smul.addr %s225, 32
        %s227 = scalar_lea.vmem [#allocation5], %s226
        %s228 = smul.u32 4, %s24
        %p229 = scmp.lt.s32.totalorder %s25, 0
        %s230 = scalar_select %p229, %s25, 0
        %s231 = scalar_lea.vmem %s1, %s230
        %p232 = scmp.lt.s32.totalorder %s25, 0
        %s233 = scalar_select %p232, %s25, 0
        %s234 = scalar_lea.vmem %s2, %s233
        %s235 = smul.u32 4, %s24
        %v236 = vld [vmem:[%s199] sm:$0xff]
        %v237 = vld [vmem:[%s199 + $0x8] sm:$0xff]
        %v238 = vld [vmem:[%s199 + $0x10] sm:$0xff]
        %v239 = vld [vmem:[%s199 + $0x18] sm:$0xff]
        %v240 = vld [vmem:[%s231] sm:$0x1]
        %v242 = vlaneseq
        %v243 = vshrl.u32 %v242, 7
        %v244 = vsub.s32 0, %v243
        %v245 = vrot.slane %v240, %v244
        %v247 = vsub.f32 %v236, %v245
        %v248 = vsub.f32 %v237, %v245
        %v249 = vsub.f32 %v238, %v245
        %v250 = vsub.f32 %v239, %v245
        %v251 = vld [vmem:[%s234] sm:$0x1]
        %v253 = vlaneseq
        %v254 = vshrl.u32 %v253, 7
        %v255 = vsub.s32 0, %v254
        %v256 = vrot.slane %v251, %v255
        %v258 = vmul.f32 %v247, %v256
        %v259 = vmul.f32 %v248, %v256
        %v260 = vmul.f32 %v249, %v256
        %v261 = vmul.f32 %v250, %v256
        %262 = vst [vmem:[%s227] sm:$0xff] %v258
        %263 = vst [vmem:[%s227 + $0x8] sm:$0xff] %v259
        %264 = vst [vmem:[%s227 + $0x10] sm:$0xff] %v260
        %265 = vst [vmem:[%s227 + $0x18] sm:$0xff] %v261
        %s266 = sand.u32 %s122, 1
        %s267 = scalar_lea.sflag [#allocation4], %s266
        %s268 = sand.u32 %s122, 1
        %s269 = smul.addr %s268, 32
        %s270 = scalar_lea.vmem [#allocation5], %s269
        // Predicated region
        $region37: #{tpu_custom_call.1} parent=31 // pred_check
          %p271 = pneg %p132
        $region38: #{tpu_custom_call.1} parent=31 // pred_check_branch
          %273 = sbr.rel (%p271) target = $region40
        $region39: #{tpu_custom_call.1} parent=31 // pred_region
          %s274 = smul.u32 4, %s24
          %s276 = ssub.s32 512, 512
          %277 = vsyncadd %s267, %s276
          %s278 = sadd.s32 %s25, %s274
          %s279 = smul.addr %s278, 128
          %s280 = scalar_lea.hbm %s3, %s279
          %s281 = sshll.u32 %s270, 4
          %s282 = int_to_ptr.vmem [resolvable:$true] %s281
          %287 = dma.vmem_to_hbm [thread:$0]  %s282, 512, %s280, %s267, 128, 128, 8
        $region40: #{tpu_custom_call.1} parent=31 // pred_fallthru
          _
      $region32: #{tpu_custom_call.1} parent=5 // pred_fallthru
        _
      %p288 = scmp.le.s32.totalorder 2, %s15
      // Predicated region
      $region41: #{tpu_custom_call.1} parent=5 // pred_check
        %p289 = pneg %p288
      $region42: #{tpu_custom_call.1} parent=5 // pred_check_branch
        %291 = sbr.rel (%p289) target = $region44
      $region43: #{tpu_custom_call.1} parent=5 // pred_region
        %s292 = ssub.s32 %s15, 2
        // Predicated region
        $region45: #{tpu_custom_call.1} parent=43 // pred_check
          %p293 = pneg %p138
        $region46: #{tpu_custom_call.1} parent=43 // pred_check_branch
          %295 = sbr.rel (%p293) target = $region48
        $region47: #{tpu_custom_call.1} parent=43 // pred_region
          %s296 = sand.u32 %s123, 1
          %s297 = scalar_lea.sflag [#allocation4], %s296
          %s298 = sand.u32 %s123, 1
          %s299 = smul.addr %s298, 32
          %s300 = scalar_lea.vmem [#allocation5], %s299
          %301 = dma.done %s297, 512
        $region48: #{tpu_custom_call.1} parent=43 // pred_fallthru
          _
      $region44: #{tpu_custom_call.1} parent=5 // pred_fallthru
        _
    $region6: #{tpu_custom_call.1} parent=1 // loop_footer
      %s19 = sadd.s32 1, %s15
    $region7: #{tpu_custom_call.1} parent=1 // loop_footer_branch
      %14 = sbr.rel target = $region3
    $region8: #{tpu_custom_call.1} parent=1 // loop_exit
      _
    %302 = vsyncpa [#allocation3], 1
    %s303 = scalar_lea.sflag [#allocation3], 1
    %304 = vsyncpa %s303, 1
    %305 = vsyncpa [#allocation4], 1
    %s306 = scalar_lea.sflag [#allocation4], 1
    %307 = vsyncpa %s306, 1

</llo_original>
